<compile_context>
chip_gen: v5e
topology: v5e:2x2
jax: 0.10.0
libtpu: 0.0.40
codegen_flags: <defaults>
</compile_context>

<pallas_src>
import math
import functools

import jax
import jax.numpy as jnp
from jax import lax
from jax.experimental import pallas as pl
from jax.experimental.pallas import tpu as pltpu

BN_EPS = 1e-5
_MXU_DTYPE = jnp.bfloat16        # set to jnp.float32 for exact-f32 matmul semantics
_MAX_TILE_N = 8192               # rows per grid step (upper bound)
_VMEM_LIMIT = 32 * 1024 * 1024   # scoped-VMEM budget, safe on v5e/v6e/v7x


def _round_up(a, b):
    return (a + b - 1) // b * b


def _choose_group(cout_last):
    """Rows packed per lane-row so the packed output channel dim is lane-dense."""
    g = 128 // math.gcd(128, int(cout_last))
    return max(1, min(g, 16))


def _choose_tile(n, base, max_tile):
    """Largest power-of-two multiple of `base` (<= max_tile) with small padding waste."""
    cap = min(max_tile, _round_up(n, base))
    best = base
    t = base
    while t <= cap:
        waste = _round_up(n, t) - n
        if waste * 8 <= n or waste < 2 * base:
            best = t
        t *= 2
    return best


def _apply_chain(x, w_list, scale_list, shift_list, relu_flags):
    """Apply len(scale_list) full (matmul + BN affine + act) layers in packed
    layout, then one extra plain matmul if an extra weight is supplied."""
    h = x.astype(_MXU_DTYPE)
    y = None
    n_full = len(scale_list)
    for l in range(n_full):
        y = jnp.dot(h, w_list[l], preferred_element_type=jnp.float32)
        y = y * scale_list[l] + shift_list[l]
        if relu_flags[l]:
            y = jnp.maximum(y, 0.0)
        h = y.astype(_MXU_DTYPE)
    if len(w_list) == n_full + 1:
        y = jnp.dot(h, w_list[n_full], preferred_element_type=jnp.float32)
    return y


def _stats_kernel(*refs, lidx, relu_flags, g, cout, n_valid, needs_mask,
                  tiles_per_shard, tile_rows):
    """Accumulate per-packed-channel sum / sum-of-squares of layer `lidx`'s
    pre-BN activation, recomputing the chain from x inside VMEM."""
    x_ref = refs[0]
    w_refs = refs[1:2 + lidx]
    s_refs = refs[2 + lidx:2 + 2 * lidx]
    b_refs = refs[2 + 2 * lidx:2 + 3 * lidx]
    sum_ref, sq_ref = refs[-2], refs[-1]

    c = pl.program_id(0)
    i = pl.program_id(1)

    @pl.when(i == 0)
    def _():
        sum_ref[...] = jnp.zeros_like(sum_ref)
        sq_ref[...] = jnp.zeros_like(sq_ref)

    y = _apply_chain(x_ref[...],
                     [w[...] for w in w_refs],
                     [s[...] for s in s_refs],
                     [b[...] for b in b_refs],
                     relu_flags)                              # (tile_rows, g*cout) f32

    if needs_mask:
        # Zero the contribution of padded rows (original row index >= n_valid).
        rowp = lax.broadcasted_iota(jnp.int32, y.shape, 0)
        lane = lax.broadcasted_iota(jnp.int32, y.shape, 1)
        orig_row = ((c * tiles_per_shard + i) * tile_rows + rowp) * g + lane // cout
        y = jnp.where(orig_row < n_valid, y, 0.0)

    sum_ref[...] += jnp.sum(y, axis=0, keepdims=True)[None]      # (1,1,g*cout)
    sq_ref[...] += jnp.sum(y * y, axis=0, keepdims=True)[None]   # (1,1,g*cout)


def _norm_kernel(*refs, n_layers, relu_flags):
    """Recompute the full chain and apply every BN affine (+ReLU); lane-dense store."""
    x_ref = refs[0]
    w_refs = refs[1:1 + n_layers]
    s_refs = refs[1 + n_layers:1 + 2 * n_layers]
    b_refs = refs[1 + 2 * n_layers:1 + 3 * n_layers]
    o_ref = refs[-1]
    y = _apply_chain(x_ref[...],
                     [w[...] for w in w_refs],
                     [s[...] for s in s_refs],
                     [b[...] for b in b_refs],
                     relu_flags)
    o_ref[...] = y.astype(o_ref.dtype)


def _stats_pass(x_packed, w_packed, scales, shifts, relu_flags, *,
                lidx, g, cout, n_valid, n_pad, tile_n, num_shards):
    rows_packed, cin_packed = x_packed.shape
    tile_rows = tile_n // g
    n_tiles = n_pad // tile_n
    tiles_per_shard = n_tiles // num_shards
    G = g * cout

    x_spec = pl.BlockSpec((tile_rows, cin_packed),
                          lambda c, i: (c * tiles_per_shard + i, 0))

    def full2d(arr):
        return pl.BlockSpec(arr.shape, lambda c, i: (0, 0))

    in_specs = [x_spec]
    in_specs += [full2d(w) for w in w_packed[:lidx + 1]]
    in_specs += [full2d(s) for s in scales[:lidx]]
    in_specs += [full2d(s) for s in shifts[:lidx]]

    vec_spec = pl.BlockSpec((1, 1, G), lambda c, i: (c, 0, 0))

    cost = pl.CostEstimate(
        flops=int(2 * (n_pad // g) *
                  sum(int(w.shape[0]) * int(w.shape[1]) for w in w_packed[:lidx + 1])),
        transcendentals=0,
        bytes_accessed=int(x_packed.size * x_packed.dtype.itemsize
                           + sum(int(w.size) * w.dtype.itemsize
                                 for w in w_packed[:lidx + 1])
                           + 2 * num_shards * G * 4))

    kernel = functools.partial(
        _stats_kernel, lidx=lidx, relu_flags=tuple(relu_flags[:lidx]),
        g=g, cout=cout, n_valid=n_valid,
        needs_mask=(n_pad != n_valid and lidx > 0),
        tiles_per_shard=tiles_per_shard, tile_rows=tile_rows)

    s_sum, s_sq = pl.pallas_call(
        kernel,
        out_shape=(jax.ShapeDtypeStruct((num_shards, 1, G), jnp.float32),
                   jax.ShapeDtypeStruct((num_shards, 1, G), jnp.float32)),
        grid=(num_shards, tiles_per_shard),
        in_specs=in_specs,
        out_specs=(vec_spec, vec_spec),
        compiler_params=pltpu.CompilerParams(
            dimension_semantics=("parallel", "arbitrary"),
            vmem_limit_bytes=_VMEM_LIMIT),
        cost_estimate=cost,
    )(x_packed, *w_packed[:lidx + 1], *scales[:lidx], *shifts[:lidx])
    return s_sum, s_sq


def _normalize_pass(x_packed, w_packed, scales, shifts, relu_flags, *,
                    g, cout_last, n_pad, tile_n):
    tile_rows = tile_n // g
    n_tiles = n_pad // tile_n
    cin_packed = x_packed.shape[1]
    G = g * cout_last
    L = len(w_packed)

    x_spec = pl.BlockSpec((tile_rows, cin_packed), lambda i: (i, 0))

    def full2d(arr):
        return pl.BlockSpec(arr.shape, lambda i: (0, 0))

    in_specs = [x_spec] + [full2d(w) for w in w_packed] \
               + [full2d(s) for s in scales] + [full2d(s) for s in shifts]
    out_spec = pl.BlockSpec((tile_rows, G), lambda i: (i, 0))

    cost = pl.CostEstimate(
        flops=int(2 * (n_pad // g) *
                  sum(int(w.shape[0]) * int(w.shape[1]) for w in w_packed)),
        transcendentals=0,
        bytes_accessed=int(x_packed.size * x_packed.dtype.itemsize
                           + (n_pad // g) * G * 4))

    kernel = functools.partial(_norm_kernel, n_layers=L, relu_flags=tuple(relu_flags))

    return pl.pallas_call(
        kernel,
        out_shape=jax.ShapeDtypeStruct((n_pad // g, G), jnp.float32),
        grid=(n_tiles,),
        in_specs=in_specs,
        out_specs=out_spec,
        compiler_params=pltpu.CompilerParams(
            dimension_semantics=("parallel",),
            vmem_limit_bytes=_VMEM_LIMIT),
        cost_estimate=cost,
    )(x_packed, *w_packed, *scales, *shifts)


def init_fc_params(key, input_dims, units):
    """xavier_uniform_ on the 1x1 conv weight; BatchNorm gamma=1 / beta=0.
    The conv bias is zero-initialized in the module AND exactly cancelled by
    BN's mean subtraction, so it is omitted."""
    params = []
    for din, dout in zip(input_dims, units):
        key, sub = jax.random.split(key)
        bound = math.sqrt(6.0 / (din + dout))   # fan_in=din, fan_out=dout (1x1 kernel)
        w = jax.random.uniform(sub, (din, dout), jnp.float32, -bound, bound)
        gamma = jnp.ones((dout,), jnp.float32)
        beta = jnp.zeros((dout,), jnp.float32)
        params.append((w, gamma, beta))
    return params


def fc_forward(x, params, activations, *, max_tile_n=_MAX_TILE_N):
    """FC.forward: x [B, H, W, C] -> [B, H, W, units[-1]] (training-mode BN)."""
    B, H, W, C = x.shape
    n = B * H * W
    L = len(params)
    assert len(activations) == L
    couts = [int(w.shape[1]) for (w, _, _) in params]
    assert int(params[0][0].shape[0]) == C
    cout_last = couts[-1]
    relu_flags = [a == "relu" for a in activations]

    # --- lane-dense packed layout: g consecutive rows share one lane-row ----
    g = _choose_group(cout_last)
    base = 16 * g                                  # bf16 sublane tile x row group
    tile_n = _choose_tile(n, base, max(max_tile_n, base))
    n_pad = _round_up(n, tile_n)
    n_tiles = n_pad // tile_n
    num_shards = 2 if (n_tiles % 2 == 0 and n_tiles >= 2) else 1

    h = x.reshape(n, C).astype(_MXU_DTYPE)
    if n_pad != n:
        h = jnp.pad(h, ((0, n_pad - n), (0, 0)))   # padded rows masked in stats
    x_packed = h.reshape(n_pad // g, g * C)        # free row-major reshape

    # Block-diagonal packed weights: g copies of W along the diagonal.
    eye_g = jnp.eye(g, dtype=jnp.float32)
    w_packed = [jnp.kron(eye_g, w).astype(_MXU_DTYPE) for (w, _, _) in params]

    # --- per-layer stats pass + tiny XLA epilogue ----------------------------
    scales, shifts = [], []
    for lidx, ((w, gamma, beta), cout) in enumerate(zip(params, couts)):
        s_sum, s_sq = _stats_pass(x_packed, w_packed, scales, shifts, relu_flags,
                                  lidx=lidx, g=g, cout=cout, n_valid=n,
                                  n_pad=n_pad, tile_n=tile_n,
                                  num_shards=num_shards)
        s_sum = jnp.sum(s_sum, axis=0).reshape(g, cout).sum(axis=0)   # (cout,)
        s_sq = jnp.sum(s_sq, axis=0).reshape(g, cout).sum(axis=0)     # (cout,)
        mean = s_sum / n
        var = jnp.maximum(s_sq / n - mean * mean, 0.0)   # biased (training-mode BN)
        scale_c = gamma * lax.rsqrt(var + BN_EPS)
        shift_c = beta - mean * scale_c
        scales.append(jnp.tile(scale_c.reshape(1, cout), (1, g)))     # (1, g*cout)
        shifts.append(jnp.tile(shift_c.reshape(1, cout), (1, g)))

    # --- final fused normalize pass (only HBM write of the whole FC) --------
    out_packed = _normalize_pass(x_packed, w_packed, scales, shifts, relu_flags,
                                 g=g, cout_last=cout_last, n_pad=n_pad,
                                 tile_n=tile_n)
    out = out_packed.reshape(n_pad, cout_last)[:n]
    return out.reshape(B, H, W, cout_last)


def fc_reference(x, params, activations):
    """Pure-JAX f32 reference of the PyTorch module (training-mode BN)."""
    B, H, W, C = x.shape
    h = x.reshape(-1, C).astype(jnp.float32)
    for (w, gamma, beta), act in zip(params, activations):
        y = h @ w
        mean = y.mean(axis=0)
        var = ((y - mean) ** 2).mean(axis=0)
        y = (y - mean) * (gamma * lax.rsqrt(var + BN_EPS)) + beta
        if act == "relu":
            y = jnp.maximum(y, 0.0)
        h = y
    return h.reshape(B, H, W, -1)


if __name__ == "__main__":
    # Small shapes consistent with GMAN usage of FC: x is [B, T, N, D] = [B, H, W, C].
    B, H, W, C_IN = 2, 8, 16, 4
    UNITS = [32, 32]
    INPUT_DIMS = [C_IN, 32]
    ACTIVATIONS = ["relu", None]   # typical GMAN FC: [relu, None]

    key = jax.random.PRNGKey(0)
    key, kx = jax.random.split(key)
    x = jax.random.normal(kx, (B, H, W, C_IN), dtype=jnp.float32)
    params = init_fc_params(key, INPUT_DIMS, UNITS)

    fwd = jax.jit(functools.partial(fc_forward, activations=tuple(ACTIVATIONS)))
    out = jax.block_until_ready(fwd(x, params))

    assert out.shape == (B, H, W, UNITS[-1]), out.shape
    assert bool(jnp.all(jnp.isfinite(out)))

    ref = fc_reference(x, params, ACTIVATIONS)
    max_err = float(jnp.max(jnp.abs(out - ref)))
    assert max_err < 0.2, f"mismatch vs reference: max_err={max_err}"

    print("KERNEL_OK")
</pallas_src>

<mosaic_0001>
module attributes {stable_mosaic.version = 11 : i64} {
  func.func @_stats_kernel(%arg0: i32, %arg1: i32, %arg2: memref<64x16xbf16, #tpu.memory_space<vmem>>, %arg3: memref<16x128xbf16, #tpu.memory_space<vmem>>, %arg4: memref<1x1x128xf32, #tpu.memory_space<vmem>>, %arg5: memref<1x1x128xf32, #tpu.memory_space<vmem>>) attributes {dimension_semantics = [#tpu.dimension_semantics<parallel>, #tpu.dimension_semantics<arbitrary>], iteration_bounds = array<i64: 1, 1>, scalar_prefetch = 0 : i64, scratch_operands = 0 : i64, tpu.core_type = #tpu.core_type<tc>, window_params = [{transform_indices = @transform_0, window_bounds = array<i64: 64, 16>}, {pipeline_mode = #tpu.pipeline_mode<synchronous>, transform_indices = @transform_1, window_bounds = array<i64: 16, 128>}, {transform_indices = @transform_2, window_bounds = array<i64: 1, 1, 128>}, {transform_indices = @transform_3, window_bounds = array<i64: 1, 1, 128>}]} {
    %c0_i32 = arith.constant 0 : i32
    %0 = arith.cmpi eq, %arg1, %c0_i32 : i32
    %1 = arith.extui %0 : i1 to i32
    %c0_i32_0 = arith.constant 0 : i32
    %2 = arith.cmpi ne, %1, %c0_i32_0 : i32
    scf.if %2 {
      %cst_18 = arith.constant 0.000000e+00 : f32
      %19 = vector.broadcast %cst_18 : f32 to vector<1x1x128xf32>
      %c0_19 = arith.constant 0 : index
      %c0_20 = arith.constant 0 : index
      %c0_21 = arith.constant 0 : index
      %20 = vector.load %arg4[%c0_19, %c0_20, %c0_21] : memref<1x1x128xf32, #tpu.memory_space<vmem>>, vector<1x1x128xf32>
      tpu.vector_store %arg4[%c0_19, %c0_20, %c0_21], %19 {strides = array<i32>} : memref<1x1x128xf32, #tpu.memory_space<vmem>>, vector<1x1x128xf32>,
      %cst_22 = arith.constant 0.000000e+00 : f32
      %21 = vector.broadcast %cst_22 : f32 to vector<1x1x128xf32>
      %c0_23 = arith.constant 0 : index
      %c0_24 = arith.constant 0 : index
      %c0_25 = arith.constant 0 : index
      %22 = vector.load %arg5[%c0_23, %c0_24, %c0_25] : memref<1x1x128xf32, #tpu.memory_space<vmem>>, vector<1x1x128xf32>
      tpu.vector_store %arg5[%c0_23, %c0_24, %c0_25], %21 {strides = array<i32>} : memref<1x1x128xf32, #tpu.memory_space<vmem>>, vector<1x1x128xf32>,
    } else {
    }
    %c0 = arith.constant 0 : index
    %c0_1 = arith.constant 0 : index
    %3 = vector.load %arg2[%c0, %c0_1] : memref<64x16xbf16, #tpu.memory_space<vmem>>, vector<64x16xbf16>
    %c0_2 = arith.constant 0 : index
    %c0_3 = arith.constant 0 : index
    %4 = vector.load %arg3[%c0_2, %c0_3] : memref<16x128xbf16, #tpu.memory_space<vmem>>, vector<16x128xbf16>
    %cst = arith.constant dense<0.000000e+00> : vector<64x128xf32>
    %5 = tpu.matmul %3, %4, %cst {dimension_numbers = #tpu.dot_dimension_numbers<[1], [0], [0], [1], [0, 0, 1, 1], [], []>} : vector<64x16xbf16>, vector<16x128xbf16>, vector<64x128xf32> -> vector<64x128xf32>
    %c0_4 = arith.constant 0 : index
    %c0_5 = arith.constant 0 : index
    %c0_6 = arith.constant 0 : index
    %6 = vector.load %arg4[%c0_4, %c0_5, %c0_6] : memref<1x1x128xf32, #tpu.memory_space<vmem>>, vector<1x1x128xf32>
    %cst_7 = arith.constant dense<0.000000e+00> : vector<128xf32>
    %7 = vector.multi_reduction <add>, %5, %cst_7 [0] : vector<64x128xf32> to vector<128xf32>
    %8 = vector.shape_cast %7 : vector<128xf32> to vector<1x128xf32>
    %9 = vector.shape_cast %8 : vector<1x128xf32> to vector<1x1x128xf32>
    %10 = arith.addf %6, %9 : vector<1x1x128xf32>
    %c0_8 = arith.constant 0 : index
    %c0_9 = arith.constant 0 : index
    %c0_10 = arith.constant 0 : index
    %11 = vector.load %arg4[%c0_8, %c0_9, %c0_10] : memref<1x1x128xf32, #tpu.memory_space<vmem>>, vector<1x1x128xf32>
    tpu.vector_store %arg4[%c0_8, %c0_9, %c0_10], %10 {strides = array<i32>} : memref<1x1x128xf32, #tpu.memory_space<vmem>>, vector<1x1x128xf32>,
    %c0_11 = arith.constant 0 : index
    %c0_12 = arith.constant 0 : index
    %c0_13 = arith.constant 0 : index
    %12 = vector.load %arg5[%c0_11, %c0_12, %c0_13] : memref<1x1x128xf32, #tpu.memory_space<vmem>>, vector<1x1x128xf32>
    %13 = arith.mulf %5, %5 : vector<64x128xf32>
    %cst_14 = arith.constant dense<0.000000e+00> : vector<128xf32>
    %14 = vector.multi_reduction <add>, %13, %cst_14 [0] : vector<64x128xf32> to vector<128xf32>
    %15 = vector.shape_cast %14 : vector<128xf32> to vector<1x128xf32>
    %16 = vector.shape_cast %15 : vector<1x128xf32> to vector<1x1x128xf32>
    %17 = arith.addf %12, %16 : vector<1x1x128xf32>
    %c0_15 = arith.constant 0 : index
    %c0_16 = arith.constant 0 : index
    %c0_17 = arith.constant 0 : index
    %18 = vector.load %arg5[%c0_15, %c0_16, %c0_17] : memref<1x1x128xf32, #tpu.memory_space<vmem>>, vector<1x1x128xf32>
    tpu.vector_store %arg5[%c0_15, %c0_16, %c0_17], %17 {strides = array<i32>} : memref<1x1x128xf32, #tpu.memory_space<vmem>>, vector<1x1x128xf32>,
    return
  }
  func.func @transform_0(%arg0: i32, %arg1: i32) -> (i32, i32) {
    %c1_i32 = arith.constant 1 : i32
    %0 = arith.muli %arg0, %c1_i32 : i32
    %1 = arith.addi %0, %arg1 : i32
    %c0_i32 = arith.constant 0 : i32
    %c0_i32_0 = arith.constant 0 : i32
    return %1, %c0_i32 : i32, i32
  }
  func.func @transform_1(%arg0: i32, %arg1: i32) -> (i32, i32) {
    %c0_i32 = arith.constant 0 : i32
    %c0_i32_0 = arith.constant 0 : i32
    %c0_i32_1 = arith.constant 0 : i32
    return %c0_i32, %c0_i32_0 : i32, i32
  }
  func.func @transform_2(%arg0: i32, %arg1: i32) -> (i32, i32, i32) {
    %c0_i32 = arith.constant 0 : i32
    %c0_i32_0 = arith.constant 0 : i32
    %c0_i32_1 = arith.constant 0 : i32
    return %arg0, %c0_i32, %c0_i32_0 : i32, i32, i32
  }
  func.func @transform_3(%arg0: i32, %arg1: i32) -> (i32, i32, i32) {
    %c0_i32 = arith.constant 0 : i32
    %c0_i32_0 = arith.constant 0 : i32
    %c0_i32_1 = arith.constant 0 : i32
    return %arg0, %c0_i32, %c0_i32_0 : i32, i32, i32
  }
}

module attributes {stable_mosaic.version = 11 : i64} {
  func.func @_stats_kernel(%arg0: i32, %arg1: i32, %arg2: memref<64x16xbf16, #tpu.memory_space<vmem>>, %arg3: memref<16x128xbf16, #tpu.memory_space<vmem>>, %arg4: memref<128x128xbf16, #tpu.memory_space<vmem>>, %arg5: memref<1x128xf32, #tpu.memory_space<vmem>>, %arg6: memref<1x128xf32, #tpu.memory_space<vmem>>, %arg7: memref<1x1x128xf32, #tpu.memory_space<vmem>>, %arg8: memref<1x1x128xf32, #tpu.memory_space<vmem>>) attributes {dimension_semantics = [#tpu.dimension_semantics<parallel>, #tpu.dimension_semantics<arbitrary>], iteration_bounds = array<i64: 1, 1>, scalar_prefetch = 0 : i64, scratch_operands = 0 : i64, tpu.core_type = #tpu.core_type<tc>, window_params = [{transform_indices = @transform_0, window_bounds = array<i64: 64, 16>}, {pipeline_mode = #tpu.pipeline_mode<synchronous>, transform_indices = @transform_1, window_bounds = array<i64: 16, 128>}, {pipeline_mode = #tpu.pipeline_mode<synchronous>, transform_indices = @transform_2, window_bounds = array<i64: 128, 128>}, {pipeline_mode = #tpu.pipeline_mode<synchronous>, transform_indices = @transform_3, window_bounds = array<i64: 1, 128>}, {pipeline_mode = #tpu.pipeline_mode<synchronous>, transform_indices = @transform_4, window_bounds = array<i64: 1, 128>}, {transform_indices = @transform_5, window_bounds = array<i64: 1, 1, 128>}, {transform_indices = @transform_6, window_bounds = array<i64: 1, 1, 128>}]} {
    %c0_i32 = arith.constant 0 : i32
    %0 = arith.cmpi eq, %arg1, %c0_i32 : i32
    %1 = arith.extui %0 : i1 to i32
    %c0_i32_0 = arith.constant 0 : i32
    %2 = arith.cmpi ne, %1, %c0_i32_0 : i32
    scf.if %2 {
      %cst_26 = arith.constant 0.000000e+00 : f32
      %30 = vector.broadcast %cst_26 : f32 to vector<1x1x128xf32>
      %c0_27 = arith.constant 0 : index
      %c0_28 = arith.constant 0 : index
      %c0_29 = arith.constant 0 : index
      %31 = vector.load %arg7[%c0_27, %c0_28, %c0_29] : memref<1x1x128xf32, #tpu.memory_space<vmem>>, vector<1x1x128xf32>
      tpu.vector_store %arg7[%c0_27, %c0_28, %c0_29], %30 {strides = array<i32>} : memref<1x1x128xf32, #tpu.memory_space<vmem>>, vector<1x1x128xf32>,
      %cst_30 = arith.constant 0.000000e+00 : f32
      %32 = vector.broadcast %cst_30 : f32 to vector<1x1x128xf32>
      %c0_31 = arith.constant 0 : index
      %c0_32 = arith.constant 0 : index
      %c0_33 = arith.constant 0 : index
      %33 = vector.load %arg8[%c0_31, %c0_32, %c0_33] : memref<1x1x128xf32, #tpu.memory_space<vmem>>, vector<1x1x128xf32>
      tpu.vector_store %arg8[%c0_31, %c0_32, %c0_33], %32 {strides = array<i32>} : memref<1x1x128xf32, #tpu.memory_space<vmem>>, vector<1x1x128xf32>,
    } else {
    }
    %c0 = arith.constant 0 : index
    %c0_1 = arith.constant 0 : index
    %3 = vector.load %arg2[%c0, %c0_1] : memref<64x16xbf16, #tpu.memory_space<vmem>>, vector<64x16xbf16>
    %c0_2 = arith.constant 0 : index
    %c0_3 = arith.constant 0 : index
    %4 = vector.load %arg3[%c0_2, %c0_3] : memref<16x128xbf16, #tpu.memory_space<vmem>>, vector<16x128xbf16>
    %c0_4 = arith.constant 0 : index
    %c0_5 = arith.constant 0 : index
    %5 = vector.load %arg4[%c0_4, %c0_5] : memref<128x128xbf16, #tpu.memory_space<vmem>>, vector<128x128xbf16>
    %c0_6 = arith.constant 0 : index
    %c0_7 = arith.constant 0 : index
    %6 = vector.load %arg5[%c0_6, %c0_7] : memref<1x128xf32, #tpu.memory_space<vmem>>, vector<1x128xf32>
    %c0_8 = arith.constant 0 : index
    %c0_9 = arith.constant 0 : index
    %7 = vector.load %arg6[%c0_8, %c0_9] : memref<1x128xf32, #tpu.memory_space<vmem>>, vector<1x128xf32>
    %cst = arith.constant dense<0.000000e+00> : vector<64x128xf32>
    %8 = tpu.matmul %3, %4, %cst {dimension_numbers = #tpu.dot_dimension_numbers<[1], [0], [0], [1], [0, 0, 1, 1], [], []>} : vector<64x16xbf16>, vector<16x128xbf16>, vector<64x128xf32> -> vector<64x128xf32>
    %9 = vector.broadcast %6 : vector<1x128xf32> to vector<64x128xf32>
    %10 = arith.mulf %8, %9 : vector<64x128xf32>
    %11 = vector.broadcast %7 : vector<1x128xf32> to vector<64x128xf32>
    %12 = arith.addf %10, %11 : vector<64x128xf32>
    %cst_10 = arith.constant 0.000000e+00 : f32
    %13 = vector.broadcast %cst_10 : f32 to vector<64x128xf32>
    %14 = arith.maximumf %12, %13 : vector<64x128xf32>
    %15 = arith.truncf %14 : vector<64x128xf32> to vector<64x128xbf16>
    %cst_11 = arith.constant dense<0.000000e+00> : vector<64x128xf32>
    %16 = tpu.matmul %15, %5, %cst_11 {dimension_numbers = #tpu.dot_dimension_numbers<[1], [0], [0], [1], [0, 0, 1, 1], [], []>} : vector<64x128xbf16>, vector<128x128xbf16>, vector<64x128xf32> -> vector<64x128xf32>
    %c0_12 = arith.constant 0 : index
    %c0_13 = arith.constant 0 : index
    %c0_14 = arith.constant 0 : index
    %17 = vector.load %arg7[%c0_12, %c0_13, %c0_14] : memref<1x1x128xf32, #tpu.memory_space<vmem>>, vector<1x1x128xf32>
    %cst_15 = arith.constant dense<0.000000e+00> : vector<128xf32>
    %18 = vector.multi_reduction <add>, %16, %cst_15 [0] : vector<64x128xf32> to vector<128xf32>
    %19 = vector.shape_cast %18 : vector<128xf32> to vector<1x128xf32>
    %20 = vector.shape_cast %19 : vector<1x128xf32> to vector<1x1x128xf32>
    %21 = arith.addf %17, %20 : vector<1x1x128xf32>
    %c0_16 = arith.constant 0 : index
    %c0_17 = arith.constant 0 : index
    %c0_18 = arith.constant 0 : index
    %22 = vector.load %arg7[%c0_16, %c0_17, %c0_18] : memref<1x1x128xf32, #tpu.memory_space<vmem>>, vector<1x1x128xf32>
    tpu.vector_store %arg7[%c0_16, %c0_17, %c0_18], %21 {strides = array<i32>} : memref<1x1x128xf32, #tpu.memory_space<vmem>>, vector<1x1x128xf32>,
    %c0_19 = arith.constant 0 : index
    %c0_20 = arith.constant 0 : index
    %c0_21 = arith.constant 0 : index
    %23 = vector.load %arg8[%c0_19, %c0_20, %c0_21] : memref<1x1x128xf32, #tpu.memory_space<vmem>>, vector<1x1x128xf32>
    %24 = arith.mulf %16, %16 : vector<64x128xf32>
    %cst_22 = arith.constant dense<0.000000e+00> : vector<128xf32>
    %25 = vector.multi_reduction <add>, %24, %cst_22 [0] : vector<64x128xf32> to vector<128xf32>
    %26 = vector.shape_cast %25 : vector<128xf32> to vector<1x128xf32>
    %27 = vector.shape_cast %26 : vector<1x128xf32> to vector<1x1x128xf32>
    %28 = arith.addf %23, %27 : vector<1x1x128xf32>
    %c0_23 = arith.constant 0 : index
    %c0_24 = arith.constant 0 : index
    %c0_25 = arith.constant 0 : index
    %29 = vector.load %arg8[%c0_23, %c0_24, %c0_25] : memref<1x1x128xf32, #tpu.memory_space<vmem>>, vector<1x1x128xf32>
    tpu.vector_store %arg8[%c0_23, %c0_24, %c0_25], %28 {strides = array<i32>} : memref<1x1x128xf32, #tpu.memory_space<vmem>>, vector<1x1x128xf32>,
    return
  }
  func.func @transform_0(%arg0: i32, %arg1: i32) -> (i32, i32) {
    %c1_i32 = arith.constant 1 : i32
    %0 = arith.muli %arg0, %c1_i32 : i32
    %1 = arith.addi %0, %arg1 : i32
    %c0_i32 = arith.constant 0 : i32
    %c0_i32_0 = arith.constant 0 : i32
    return %1, %c0_i32 : i32, i32
  }
  func.func @transform_1(%arg0: i32, %arg1: i32) -> (i32, i32) {
    %c0_i32 = arith.constant 0 : i32
    %c0_i32_0 = arith.constant 0 : i32
    %c0_i32_1 = arith.constant 0 : i32
    return %c0_i32, %c0_i32_0 : i32, i32
  }
  func.func @transform_2(%arg0: i32, %arg1: i32) -> (i32, i32) {
    %c0_i32 = arith.constant 0 : i32
    %c0_i32_0 = arith.constant 0 : i32
    %c0_i32_1 = arith.constant 0 : i32
    return %c0_i32, %c0_i32_0 : i32, i32
  }
  func.func @transform_3(%arg0: i32, %arg1: i32) -> (i32, i32) {
    %c0_i32 = arith.constant 0 : i32
    %c0_i32_0 = arith.constant 0 : i32
    %c0_i32_1 = arith.constant 0 : i32
    return %c0_i32, %c0_i32_0 : i32, i32
  }
  func.func @transform_4(%arg0: i32, %arg1: i32) -> (i32, i32) {
    %c0_i32 = arith.constant 0 : i32
    %c0_i32_0 = arith.constant 0 : i32
    %c0_i32_1 = arith.constant 0 : i32
    return %c0_i32, %c0_i32_0 : i32, i32
  }
  func.func @transform_5(%arg0: i32, %arg1: i32) -> (i32, i32, i32) {
    %c0_i32 = arith.constant 0 : i32
    %c0_i32_0 = arith.constant 0 : i32
    %c0_i32_1 = arith.constant 0 : i32
    return %arg0, %c0_i32, %c0_i32_0 : i32, i32, i32
  }
  func.func @transform_6(%arg0: i32, %arg1: i32) -> (i32, i32, i32) {
    %c0_i32 = arith.constant 0 : i32
    %c0_i32_0 = arith.constant 0 : i32
    %c0_i32_1 = arith.constant 0 : i32
    return %arg0, %c0_i32, %c0_i32_0 : i32, i32, i32
  }
}

module attributes {stable_mosaic.version = 11 : i64} {
  func.func @_norm_kernel(%arg0: i32, %arg1: memref<64x16xbf16, #tpu.memory_space<vmem>>, %arg2: memref<16x128xbf16, #tpu.memory_space<vmem>>, %arg3: memref<128x128xbf16, #tpu.memory_space<vmem>>, %arg4: memref<1x128xf32, #tpu.memory_space<vmem>>, %arg5: memref<1x128xf32, #tpu.memory_space<vmem>>, %arg6: memref<1x128xf32, #tpu.memory_space<vmem>>, %arg7: memref<1x128xf32, #tpu.memory_space<vmem>>, %arg8: memref<64x128xf32, #tpu.memory_space<vmem>>) attributes {dimension_semantics = [#tpu.dimension_semantics<parallel>], iteration_bounds = array<i64: 1>, scalar_prefetch = 0 : i64, scratch_operands = 0 : i64, tpu.core_type = #tpu.core_type<tc>, window_params = [{transform_indices = @transform_0, window_bounds = array<i64: 64, 16>}, {pipeline_mode = #tpu.pipeline_mode<synchronous>, transform_indices = @transform_1, window_bounds = array<i64: 16, 128>}, {pipeline_mode = #tpu.pipeline_mode<synchronous>, transform_indices = @transform_2, window_bounds = array<i64: 128, 128>}, {pipeline_mode = #tpu.pipeline_mode<synchronous>, transform_indices = @transform_3, window_bounds = array<i64: 1, 128>}, {pipeline_mode = #tpu.pipeline_mode<synchronous>, transform_indices = @transform_4, window_bounds = array<i64: 1, 128>}, {pipeline_mode = #tpu.pipeline_mode<synchronous>, transform_indices = @transform_5, window_bounds = array<i64: 1, 128>}, {pipeline_mode = #tpu.pipeline_mode<synchronous>, transform_indices = @transform_6, window_bounds = array<i64: 1, 128>}, {transform_indices = @transform_7, window_bounds = array<i64: 64, 128>}]} {
    %c0 = arith.constant 0 : index
    %c0_0 = arith.constant 0 : index
    %0 = vector.load %arg1[%c0, %c0_0] : memref<64x16xbf16, #tpu.memory_space<vmem>>, vector<64x16xbf16>
    %c0_1 = arith.constant 0 : index
    %c0_2 = arith.constant 0 : index
    %1 = vector.load %arg2[%c0_1, %c0_2] : memref<16x128xbf16, #tpu.memory_space<vmem>>, vector<16x128xbf16>
    %c0_3 = arith.constant 0 : index
    %c0_4 = arith.constant 0 : index
    %2 = vector.load %arg3[%c0_3, %c0_4] : memref<128x128xbf16, #tpu.memory_space<vmem>>, vector<128x128xbf16>
    %c0_5 = arith.constant 0 : index
    %c0_6 = arith.constant 0 : index
    %3 = vector.load %arg4[%c0_5, %c0_6] : memref<1x128xf32, #tpu.memory_space<vmem>>, vector<1x128xf32>
    %c0_7 = arith.constant 0 : index
    %c0_8 = arith.constant 0 : index
    %4 = vector.load %arg5[%c0_7, %c0_8] : memref<1x128xf32, #tpu.memory_space<vmem>>, vector<1x128xf32>
    %c0_9 = arith.constant 0 : index
    %c0_10 = arith.constant 0 : index
    %5 = vector.load %arg6[%c0_9, %c0_10] : memref<1x128xf32, #tpu.memory_space<vmem>>, vector<1x128xf32>
    %c0_11 = arith.constant 0 : index
    %c0_12 = arith.constant 0 : index
    %6 = vector.load %arg7[%c0_11, %c0_12] : memref<1x128xf32, #tpu.memory_space<vmem>>, vector<1x128xf32>
    %cst = arith.constant dense<0.000000e+00> : vector<64x128xf32>
    %7 = tpu.matmul %0, %1, %cst {dimension_numbers = #tpu.dot_dimension_numbers<[1], [0], [0], [1], [0, 0, 1, 1], [], []>} : vector<64x16xbf16>, vector<16x128xbf16>, vector<64x128xf32> -> vector<64x128xf32>
    %8 = vector.broadcast %3 : vector<1x128xf32> to vector<64x128xf32>
    %9 = arith.mulf %7, %8 : vector<64x128xf32>
    %10 = vector.broadcast %5 : vector<1x128xf32> to vector<64x128xf32>
    %11 = arith.addf %9, %10 : vector<64x128xf32>
    %cst_13 = arith.constant 0.000000e+00 : f32
    %12 = vector.broadcast %cst_13 : f32 to vector<64x128xf32>
    %13 = arith.maximumf %11, %12 : vector<64x128xf32>
    %14 = arith.truncf %13 : vector<64x128xf32> to vector<64x128xbf16>
    %cst_14 = arith.constant dense<0.000000e+00> : vector<64x128xf32>
    %15 = tpu.matmul %14, %2, %cst_14 {dimension_numbers = #tpu.dot_dimension_numbers<[1], [0], [0], [1], [0, 0, 1, 1], [], []>} : vector<64x128xbf16>, vector<128x128xbf16>, vector<64x128xf32> -> vector<64x128xf32>
    %16 = vector.broadcast %4 : vector<1x128xf32> to vector<64x128xf32>
    %17 = arith.mulf %15, %16 : vector<64x128xf32>
    %18 = vector.broadcast %6 : vector<1x128xf32> to vector<64x128xf32>
    %19 = arith.addf %17, %18 : vector<64x128xf32>
    %c0_15 = arith.constant 0 : index
    %c0_16 = arith.constant 0 : index
    %20 = vector.load %arg8[%c0_15, %c0_16] : memref<64x128xf32, #tpu.memory_space<vmem>>, vector<64x128xf32>
    tpu.vector_store %arg8[%c0_15, %c0_16], %19 {strides = array<i32>} : memref<64x128xf32, #tpu.memory_space<vmem>>, vector<64x128xf32>,
    return
  }
  func.func @transform_0(%arg0: i32) -> (i32, i32) {
    %c0_i32 = arith.constant 0 : i32
    %c0_i32_0 = arith.constant 0 : i32
    return %arg0, %c0_i32 : i32, i32
  }
  func.func @transform_1(%arg0: i32) -> (i32, i32) {
    %c0_i32 = arith.constant 0 : i32
    %c0_i32_0 = arith.constant 0 : i32
    %c0_i32_1 = arith.constant 0 : i32
    return %c0_i32, %c0_i32_0 : i32, i32
  }
  func.func @transform_2(%arg0: i32) -> (i32, i32) {
    %c0_i32 = arith.constant 0 : i32
    %c0_i32_0 = arith.constant 0 : i32
    %c0_i32_1 = arith.constant 0 : i32
    return %c0_i32, %c0_i32_0 : i32, i32
  }
  func.func @transform_3(%arg0: i32) -> (i32, i32) {
    %c0_i32 = arith.constant 0 : i32
    %c0_i32_0 = arith.constant 0 : i32
    %c0_i32_1 = arith.constant 0 : i32
    return %c0_i32, %c0_i32_0 : i32, i32
  }
  func.func @transform_4(%arg0: i32) -> (i32, i32) {
    %c0_i32 = arith.constant 0 : i32
    %c0_i32_0 = arith.constant 0 : i32
    %c0_i32_1 = arith.constant 0 : i32
    return %c0_i32, %c0_i32_0 : i32, i32
  }
  func.func @transform_5(%arg0: i32) -> (i32, i32) {
    %c0_i32 = arith.constant 0 : i32
    %c0_i32_0 = arith.constant 0 : i32
    %c0_i32_1 = arith.constant 0 : i32
    return %c0_i32, %c0_i32_0 : i32, i32
  }
  func.func @transform_6(%arg0: i32) -> (i32, i32) {
    %c0_i32 = arith.constant 0 : i32
    %c0_i32_0 = arith.constant 0 : i32
    %c0_i32_1 = arith.constant 0 : i32
    return %c0_i32, %c0_i32_0 : i32, i32
  }
  func.func @transform_7(%arg0: i32) -> (i32, i32) {
    %c0_i32 = arith.constant 0 : i32
    %c0_i32_0 = arith.constant 0 : i32
    return %arg0, %c0_i32 : i32, i32
  }
}

</mosaic_0001>

<llo_original>
// kernel: fc_forward.3
$region0: #{fc_forward.3}
  #allocation0 [shape = 'u32[]', space=smem, size = 0x4, offset = 0x4, fixed_abs, tag = 'smem constant byte address 0x4 - core index']
  #allocation1 [shape = 'u32[72,128]{1,0:T(1,128)}', space=vmem, size = 0x9000, scoped, tag = 'internal scratch']
  %s0 = inlined_call_operand.vmem [shape: bf16[64,16], index: 0, kind: input, shape index: {}]
  %s1 = inlined_call_operand.vmem [shape: bf16[16,128], index: 1, kind: input, shape index: {}]
  %s2 = inlined_call_operand.vmem [shape: f32[1,1,128], index: 2, kind: output, shape index: {0}]
  %s3 = inlined_call_operand.vmem [shape: f32[1,1,128], index: 3, kind: output, shape index: {1}]
  %4 = xla_tuple %s2, %s3
  %s5 = sld [smem:[#allocation0]]
  $region30: #{fc_forward.3} parent=0
    _
  %s7 = ssub.s32 1, %s5
  %s8 = scalar_select 0, %s7, %s5
  // Predicated region
  $region2: #{fc_forward.3} parent=0 // pred_check
    _
  $region3: #{fc_forward.3} parent=0 // pred_check_branch
    %10 = sbr.rel (0) target = $region5
  $region4: #{fc_forward.3} parent=0 // pred_region
    %s11 = sadd.s32 0, 0
    %s12 = smul.u32 8, %s11
    %p13 = scmp.lt.s32.totalorder %s12, 7
    %s14 = scalar_select %p13, %s12, 7
    %s15 = smul.addr %s14, 4
    %s16 = scalar_lea.vmem %s0, %s15
    %s17 = sadd.s32 0, 0
    %s18 = smul.u32 8, %s17
  $region5: #{fc_forward.3} parent=0 // pred_fallthru
    _
  // Predicated region
  $region6: #{fc_forward.3} parent=0 // pred_check
    _
  $region7: #{fc_forward.3} parent=0 // pred_check_branch
    %20 = sbr.rel (0) target = $region9
  $region8: #{fc_forward.3} parent=0 // pred_region
    _
  $region9: #{fc_forward.3} parent=0 // pred_fallthru
    _
  %s21 = sadd.s32 0, 0
  %s22 = smul.u32 8, %s21
  %p23 = scmp.lt.s32.totalorder %s22, 7
  %s24 = scalar_select %p23, %s22, 7
  %s25 = smul.addr %s24, 4
  %s26 = scalar_lea.vmem %s0, %s25
  %s27 = sadd.s32 0, 0
  %s28 = smul.u32 8, %s27
  %p29 = scmp.lt.s32.totalorder %s28, 7
  %s30 = scalar_select %p29, %s28, 7
  %s31 = smul.addr %s30, 4
  %s32 = scalar_lea.vmem %s0, %s31
  %s33 = sadd.s32 0, 0
  %s34 = smul.u32 8, %s33
  %p36 = scmp.eq.s32.totalorder 0, 0
  // Predicated region
  $region10: #{fc_forward.3} parent=0 // pred_check
    %p37 = pneg %p36
  $region11: #{fc_forward.3} parent=0 // pred_check_branch
    %39 = sbr.rel (%p37) target = $region13
  $region12: #{fc_forward.3} parent=0 // pred_region
    %40 = vst [vmem:[%s2] sm:$0x1] 0.0
    %41 = vst [vmem:[%s3] sm:$0x1] 0.0
  $region13: #{fc_forward.3} parent=0 // pred_fallthru
    _
  %v42 = vld [vmem:[%s32] sm:$0xf]
  %v43 = vld [vmem:[%s32 + $0x4] sm:$0xf]
  %v44 = vld [vmem:[%s32 + $0x8] sm:$0xf]
  %v45 = vld [vmem:[%s32 + $0xc] sm:$0xf]
  %v46 = vld [vmem:[%s32 + $0x10] sm:$0xf]
  %v47 = vld [vmem:[%s32 + $0x14] sm:$0xf]
  %v48 = vld [vmem:[%s32 + $0x18] sm:$0xf]
  %v49 = vld [vmem:[%s32 + $0x1c] sm:$0xf]
  %v50 = vld [vmem:[%s1] sm:$0xf]
  %v51 = vld [vmem:[%s1 + $0x4] sm:$0xf]
  %v60 = vunpack.c.l.b16 %v42
  %v61 = vunpack.c.l.b16 %v43
  %v62 = vunpack.c.l.b16 %v44
  %v63 = vunpack.c.l.b16 %v45
  %v64 = vunpack.c.l.b16 %v46
  %v65 = vunpack.c.l.b16 %v47
  %v66 = vunpack.c.l.b16 %v48
  %v67 = vunpack.c.l.b16 %v49
  %v68 = vpack.c.b16 %v61, %v60
  %v69 = vpack.c.b16 %v63, %v62
  %v70 = vpack.c.b16 %v65, %v64
  %v71 = vpack.c.b16 %v67, %v66
  %v74 = vunpack.c.l.b16 %v50
  %v75 = vunpack.c.l.b16 %v51
  %v76 = vpack.c.b16 %v75, %v74
  %vm78 = vcmask 130048
  %v80 = vsel %vm78, %v68, 0
  %v83 = vsel %vm78, %v69, 0
  %v86 = vsel %vm78, %v70, 0
  %v89 = vsel %vm78, %v71, 0
  %91 = vmatpush.bf16.msra.mxu0 0
  %92 = vmatpush.bf16.msra.mxu0 0
  %93 = vmatpush.bf16.msra.mxu0 0
  %94 = vmatpush.bf16.msra.mxu0 0
  %95 = vmatpush.bf16.msra.mxu0 0
  %96 = vmatpush.bf16.msra.mxu0 0
  %97 = vmatpush.bf16.msra.mxu0 0
  %98 = vmatpush.bf16.msra.mxu0 %v76
  %99 = vmatmul.bf16.gmra.mxu0 %v80
  %v100 = vpop.f32.mrf.mxu0
  %v101 = vadd.f32 0.0, %v100
  %v102 = vpop.f32.mrf.mxu0
  %v103 = vadd.f32 0.0, %v102
  %104 = vmatmul.bf16.gmra.mxu0 %v83
  %v105 = vpop.f32.mrf.mxu0
  %v106 = vadd.f32 0.0, %v105
  %v107 = vpop.f32.mrf.mxu0
  %v108 = vadd.f32 0.0, %v107
  %109 = vmatmul.bf16.gmra.mxu0 %v86
  %v110 = vpop.f32.mrf.mxu0
  %v111 = vadd.f32 0.0, %v110
  %v112 = vpop.f32.mrf.mxu0
  %v113 = vadd.f32 0.0, %v112
  %114 = vmatmul.bf16.gmra.mxu0 %v89
  %v115 = vpop.f32.mrf.mxu0
  %v116 = vadd.f32 0.0, %v115
  %v117 = vpop.f32.mrf.mxu0
  %v118 = vadd.f32 0.0, %v117
  %119 = vdwg.mxu0
  %v120 = vld [vmem:[%s2] sm:$0x1]
  %v121 = vadd.f32 %v101, %v103
  %v122 = vadd.f32 %v121, %v106
  %v123 = vadd.f32 %v122, %v108
  %v124 = vadd.f32 %v123, %v111
  %v125 = vadd.f32 %v124, %v113
  %v126 = vadd.f32 %v125, %v116
  %v127 = vadd.f32 %v126, %v118
  %v128 = vrot.slane %v127, 4
  %v129 = vadd.f32 %v127, %v128
  %v130 = vrot.slane %v129, 2
  %v131 = vadd.f32 %v129, %v130
  %v132 = vrot.slane %v131, 1
  %v133 = vadd.f32 %v131, %v132
  %v134 = vadd.f32 %v120, %v133
  %135 = vst [vmem:[%s2] sm:$0x1] %v134
  %v136 = vld [vmem:[%s3] sm:$0x1]
  %v137 = vmul.f32 %v101, %v101
  %v138 = vmul.f32 %v103, %v103
  %v139 = vmul.f32 %v106, %v106
  %v140 = vmul.f32 %v108, %v108
  %v141 = vmul.f32 %v111, %v111
  %v142 = vmul.f32 %v113, %v113
  %v143 = vmul.f32 %v116, %v116
  %v144 = vmul.f32 %v118, %v118
  %v145 = vadd.f32 %v137, %v138
  %v146 = vadd.f32 %v145, %v139
  %v147 = vadd.f32 %v146, %v140
  %v148 = vadd.f32 %v147, %v141
  %v149 = vadd.f32 %v148, %v142
  %v150 = vadd.f32 %v149, %v143
  %v151 = vadd.f32 %v150, %v144
  %v152 = vrot.slane %v151, 4
  %v153 = vadd.f32 %v151, %v152
  %v154 = vrot.slane %v153, 2
  %v155 = vadd.f32 %v153, %v154
  %v156 = vrot.slane %v155, 1
  %v157 = vadd.f32 %v155, %v156
  %v158 = vadd.f32 %v136, %v157
  %159 = vst [vmem:[%s3] sm:$0x1] %v158
  // Predicated region
  $region14: #{fc_forward.3} parent=0 // pred_check
    _
  $region15: #{fc_forward.3} parent=0 // pred_check_branch
    %161 = sbr.rel (0) target = $region17
  $region16: #{fc_forward.3} parent=0 // pred_region
    _
  $region17: #{fc_forward.3} parent=0 // pred_fallthru
    _
  // Predicated region
  $region18: #{fc_forward.3} parent=0 // pred_check
    _
  $region19: #{fc_forward.3} parent=0 // pred_check_branch
    %163 = sbr.rel (0) target = $region21
  $region20: #{fc_forward.3} parent=0 // pred_region
    _
  $region21: #{fc_forward.3} parent=0 // pred_fallthru
    _
  // Predicated region
  $region22: #{fc_forward.3} parent=0 // pred_check
    _
  $region23: #{fc_forward.3} parent=0 // pred_check_branch
    %165 = sbr.rel (0) target = $region25
  $region24: #{fc_forward.3} parent=0 // pred_region
    _
  $region25: #{fc_forward.3} parent=0 // pred_fallthru
    _
  // Predicated region
  $region26: #{fc_forward.3} parent=0 // pred_check
    _
  $region27: #{fc_forward.3} parent=0 // pred_check_branch
    %167 = sbr.rel (0) target = $region29
  $region28: #{fc_forward.3} parent=0 // pred_region
    _
  $region29: #{fc_forward.3} parent=0 // pred_fallthru
    _

// kernel: fc_forward.4
$region0: #{fc_forward.4}
  #allocation0 [shape = 'u32[]', space=smem, size = 0x4, offset = 0x4, fixed_abs, tag = 'smem constant byte address 0x4 - core index']
  #allocation1 [shape = 'u32[72,128]{1,0:T(1,128)}', space=vmem, size = 0x9000, scoped, tag = 'internal scratch']
  %s0 = inlined_call_operand.vmem [shape: bf16[64,16], index: 0, kind: input, shape index: {}]
  %s1 = inlined_call_operand.vmem [shape: bf16[16,128], index: 1, kind: input, shape index: {}]
  %s2 = inlined_call_operand.vmem [shape: bf16[128,128], index: 2, kind: input, shape index: {}]
  %s3 = inlined_call_operand.vmem [shape: f32[1,128], index: 3, kind: input, shape index: {}]
  %s4 = inlined_call_operand.vmem [shape: f32[1,128], index: 4, kind: input, shape index: {}]
  %s5 = inlined_call_operand.vmem [shape: f32[1,1,128], index: 5, kind: output, shape index: {0}]
  %s6 = inlined_call_operand.vmem [shape: f32[1,1,128], index: 6, kind: output, shape index: {1}]
  %7 = xla_tuple %s5, %s6
  %s8 = sld [smem:[#allocation0]]
  $region42: #{fc_forward.4} parent=0
    _
  %s10 = ssub.s32 1, %s8
  %s11 = scalar_select 0, %s10, %s8
  // Predicated region
  $region2: #{fc_forward.4} parent=0 // pred_check
    _
  $region3: #{fc_forward.4} parent=0 // pred_check_branch
    %13 = sbr.rel (0) target = $region5
  $region4: #{fc_forward.4} parent=0 // pred_region
    %s14 = sadd.s32 0, 0
    %s15 = smul.u32 8, %s14
    %p16 = scmp.lt.s32.totalorder %s15, 7
    %s17 = scalar_select %p16, %s15, 7
    %s18 = smul.addr %s17, 4
    %s19 = scalar_lea.vmem %s0, %s18
    %s20 = sadd.s32 0, 0
    %s21 = smul.u32 8, %s20
  $region5: #{fc_forward.4} parent=0 // pred_fallthru
    _
  // Predicated region
  $region6: #{fc_forward.4} parent=0 // pred_check
    _
  $region7: #{fc_forward.4} parent=0 // pred_check_branch
    %23 = sbr.rel (0) target = $region9
  $region8: #{fc_forward.4} parent=0 // pred_region
    _
  $region9: #{fc_forward.4} parent=0 // pred_fallthru
    _
  // Predicated region
  $region10: #{fc_forward.4} parent=0 // pred_check
    _
  $region11: #{fc_forward.4} parent=0 // pred_check_branch
    %25 = sbr.rel (0) target = $region13
  $region12: #{fc_forward.4} parent=0 // pred_region
    _
  $region13: #{fc_forward.4} parent=0 // pred_fallthru
    _
  // Predicated region
  $region14: #{fc_forward.4} parent=0 // pred_check
    _
  $region15: #{fc_forward.4} parent=0 // pred_check_branch
    %27 = sbr.rel (0) target = $region17
  $region16: #{fc_forward.4} parent=0 // pred_region
    _
  $region17: #{fc_forward.4} parent=0 // pred_fallthru
    _
  // Predicated region
  $region18: #{fc_forward.4} parent=0 // pred_check
    _
  $region19: #{fc_forward.4} parent=0 // pred_check_branch
    %29 = sbr.rel (0) target = $region21
  $region20: #{fc_forward.4} parent=0 // pred_region
    _
  $region21: #{fc_forward.4} parent=0 // pred_fallthru
    _
  %s30 = sadd.s32 0, 0
  %s31 = smul.u32 8, %s30
  %p32 = scmp.lt.s32.totalorder %s31, 7
  %s33 = scalar_select %p32, %s31, 7
  %s34 = smul.addr %s33, 4
  %s35 = scalar_lea.vmem %s0, %s34
  %s36 = sadd.s32 0, 0
  %s37 = smul.u32 8, %s36
  %p38 = scmp.lt.s32.totalorder %s37, 7
  %s39 = scalar_select %p38, %s37, 7
  %s40 = smul.addr %s39, 4
  %s41 = scalar_lea.vmem %s0, %s40
  %s42 = sadd.s32 0, 0
  %s43 = smul.u32 8, %s42
  %p45 = scmp.eq.s32.totalorder 0, 0
  // Predicated region
  $region22: #{fc_forward.4} parent=0 // pred_check
    %p46 = pneg %p45
  $region23: #{fc_forward.4} parent=0 // pred_check_branch
    %48 = sbr.rel (%p46) target = $region25
  $region24: #{fc_forward.4} parent=0 // pred_region
    %49 = vst [vmem:[%s5] sm:$0x1] 0.0
    %50 = vst [vmem:[%s6] sm:$0x1] 0.0
  $region25: #{fc_forward.4} parent=0 // pred_fallthru
    _
  %v51 = vld [vmem:[%s41] sm:$0xf]
  %v52 = vld [vmem:[%s41 + $0x4] sm:$0xf]
  %v53 = vld [vmem:[%s41 + $0x8] sm:$0xf]
  %v54 = vld [vmem:[%s41 + $0xc] sm:$0xf]
  %v55 = vld [vmem:[%s41 + $0x10] sm:$0xf]
  %v56 = vld [vmem:[%s41 + $0x14] sm:$0xf]
  %v57 = vld [vmem:[%s41 + $0x18] sm:$0xf]
  %v58 = vld [vmem:[%s41 + $0x1c] sm:$0xf]
  %v59 = vld [vmem:[%s1] sm:$0xf]
  %v60 = vld [vmem:[%s1 + $0x4] sm:$0xf]
  %v61 = vld [vmem:[%s2] sm:$0xf]
  %v62 = vld [vmem:[%s2 + $0x4] sm:$0xf]
  %v63 = vld [vmem:[%s2 + $0x8] sm:$0xf]
  %v64 = vld [vmem:[%s2 + $0xc] sm:$0xf]
  %v65 = vld [vmem:[%s2 + $0x10] sm:$0xf]
  %v66 = vld [vmem:[%s2 + $0x14] sm:$0xf]
  %v67 = vld [vmem:[%s2 + $0x18] sm:$0xf]
  %v68 = vld [vmem:[%s2 + $0x1c] sm:$0xf]
  %v69 = vld [vmem:[%s2 + $0x20] sm:$0xf]
  %v70 = vld [vmem:[%s2 + $0x24] sm:$0xf]
  %v71 = vld [vmem:[%s2 + $0x28] sm:$0xf]
  %v72 = vld [vmem:[%s2 + $0x2c] sm:$0xf]
  %v73 = vld [vmem:[%s2 + $0x30] sm:$0xf]
  %v74 = vld [vmem:[%s2 + $0x34] sm:$0xf]
  %v75 = vld [vmem:[%s2 + $0x38] sm:$0xf]
  %v76 = vld [vmem:[%s2 + $0x3c] sm:$0xf]
  %v77 = vld [vmem:[%s3] sm:$0x1]
  %v78 = vld [vmem:[%s4] sm:$0x1]
  %v87 = vunpack.c.l.b16 %v51
  %v88 = vunpack.c.l.b16 %v52
  %v89 = vunpack.c.l.b16 %v53
  %v90 = vunpack.c.l.b16 %v54
  %v91 = vunpack.c.l.b16 %v55
  %v92 = vunpack.c.l.b16 %v56
  %v93 = vunpack.c.l.b16 %v57
  %v94 = vunpack.c.l.b16 %v58
  %v95 = vpack.c.b16 %v88, %v87
  %v96 = vpack.c.b16 %v90, %v89
  %v97 = vpack.c.b16 %v92, %v91
  %v98 = vpack.c.b16 %v94, %v93
  %v101 = vunpack.c.l.b16 %v59
  %v102 = vunpack.c.l.b16 %v60
  %v103 = vpack.c.b16 %v102, %v101
  %vm105 = vcmask 130048
  %v107 = vsel %vm105, %v95, 0
  %v110 = vsel %vm105, %v96, 0
  %v113 = vsel %vm105, %v97, 0
  %v116 = vsel %vm105, %v98, 0
  %118 = vmatpush.bf16.msra.mxu0 0
  %119 = vmatpush.bf16.msra.mxu0 0
  %120 = vmatpush.bf16.msra.mxu0 0
  %121 = vmatpush.bf16.msra.mxu0 0
  %122 = vmatpush.bf16.msra.mxu0 0
  %123 = vmatpush.bf16.msra.mxu0 0
  %124 = vmatpush.bf16.msra.mxu0 0
  %125 = vmatpush.bf16.msra.mxu0 %v103
  %126 = vmatmul.bf16.gmra.mxu0 %v107
  %v127 = vpop.f32.mrf.mxu0
  %v128 = vadd.f32 0.0, %v127
  %v129 = vpop.f32.mrf.mxu0
  %v130 = vadd.f32 0.0, %v129
  %131 = vmatmul.bf16.gmra.mxu0 %v110
  %v132 = vpop.f32.mrf.mxu0
  %v133 = vadd.f32 0.0, %v132
  %v134 = vpop.f32.mrf.mxu0
  %v135 = vadd.f32 0.0, %v134
  %136 = vmatmul.bf16.gmra.mxu0 %v113
  %v137 = vpop.f32.mrf.mxu0
  %v138 = vadd.f32 0.0, %v137
  %v139 = vpop.f32.mrf.mxu0
  %v140 = vadd.f32 0.0, %v139
  %141 = vmatmul.bf16.gmra.mxu0 %v116
  %v142 = vpop.f32.mrf.mxu0
  %v143 = vadd.f32 0.0, %v142
  %v144 = vpop.f32.mrf.mxu0
  %v145 = vadd.f32 0.0, %v144
  %146 = vdwg.mxu0
  %v148 = vperm.slane %v77, 0
  %v150 = vmul.f32 %v128, %v148
  %v151 = vmul.f32 %v130, %v148
  %v152 = vmul.f32 %v133, %v148
  %v153 = vmul.f32 %v135, %v148
  %v154 = vmul.f32 %v138, %v148
  %v155 = vmul.f32 %v140, %v148
  %v156 = vmul.f32 %v143, %v148
  %v157 = vmul.f32 %v145, %v148
  %v159 = vperm.slane %v78, 0
  %v161 = vadd.f32 %v150, %v159
  %v162 = vadd.f32 %v151, %v159
  %v163 = vadd.f32 %v152, %v159
  %v164 = vadd.f32 %v153, %v159
  %v165 = vadd.f32 %v154, %v159
  %v166 = vadd.f32 %v155, %v159
  %v167 = vadd.f32 %v156, %v159
  %v168 = vadd.f32 %v157, %v159
  %v169 = vmax.f32 %v161, 0.0
  %v170 = vmax.f32 %v162, 0.0
  %v171 = vmax.f32 %v163, 0.0
  %v172 = vmax.f32 %v164, 0.0
  %v173 = vmax.f32 %v165, 0.0
  %v174 = vmax.f32 %v166, 0.0
  %v175 = vmax.f32 %v167, 0.0
  %v176 = vmax.f32 %v168, 0.0
  %v177 = vpack.c.bf16 %v170, %v169
  %v178 = vpack.c.bf16 %v172, %v171
  %v179 = vpack.c.bf16 %v174, %v173
  %v180 = vpack.c.bf16 %v176, %v175
  %v197 = vunpack.c.l.b16 %v61
  %v198 = vunpack.c.l.b16 %v62
  %v199 = vunpack.c.l.b16 %v63
  %v200 = vunpack.c.l.b16 %v64
  %v201 = vunpack.c.l.b16 %v65
  %v202 = vunpack.c.l.b16 %v66
  %v203 = vunpack.c.l.b16 %v67
  %v204 = vunpack.c.l.b16 %v68
  %v205 = vunpack.c.l.b16 %v69
  %v206 = vunpack.c.l.b16 %v70
  %v207 = vunpack.c.l.b16 %v71
  %v208 = vunpack.c.l.b16 %v72
  %v209 = vunpack.c.l.b16 %v73
  %v210 = vunpack.c.l.b16 %v74
  %v211 = vunpack.c.l.b16 %v75
  %v212 = vunpack.c.l.b16 %v76
  %v213 = vpack.c.b16 %v198, %v197
  %v214 = vpack.c.b16 %v200, %v199
  %v215 = vpack.c.b16 %v202, %v201
  %v216 = vpack.c.b16 %v204, %v203
  %v217 = vpack.c.b16 %v206, %v205
  %v218 = vpack.c.b16 %v208, %v207
  %v219 = vpack.c.b16 %v210, %v209
  %v220 = vpack.c.b16 %v212, %v211
  %229 = vmatpush.bf16.msra.mxu0 %v220
  %230 = vmatpush.bf16.msra.mxu0 %v219
  %231 = vmatpush.bf16.msra.mxu0 %v218
  %232 = vmatpush.bf16.msra.mxu0 %v217
  %233 = vmatpush.bf16.msra.mxu0 %v216
  %234 = vmatpush.bf16.msra.mxu0 %v215
  %235 = vmatpush.bf16.msra.mxu0 %v214
  %236 = vmatpush.bf16.msra.mxu0 %v213
  %237 = vmatmul.bf16.gmra.mxu0 %v177
  %v238 = vpop.f32.mrf.mxu0
  %v239 = vadd.f32 0.0, %v238
  %v240 = vpop.f32.mrf.mxu0
  %v241 = vadd.f32 0.0, %v240
  %242 = vmatmul.bf16.gmra.mxu0 %v178
  %v243 = vpop.f32.mrf.mxu0
  %v244 = vadd.f32 0.0, %v243
  %v245 = vpop.f32.mrf.mxu0
  %v246 = vadd.f32 0.0, %v245
  %247 = vmatmul.bf16.gmra.mxu0 %v179
  %v248 = vpop.f32.mrf.mxu0
  %v249 = vadd.f32 0.0, %v248
  %v250 = vpop.f32.mrf.mxu0
  %v251 = vadd.f32 0.0, %v250
  %252 = vmatmul.bf16.gmra.mxu0 %v180
  %v253 = vpop.f32.mrf.mxu0
  %v254 = vadd.f32 0.0, %v253
  %v255 = vpop.f32.mrf.mxu0
  %v256 = vadd.f32 0.0, %v255
  %257 = vdwg.mxu0
  %v258 = vld [vmem:[%s5] sm:$0x1]
  %v259 = vadd.f32 %v239, %v241
  %v260 = vadd.f32 %v259, %v244
  %v261 = vadd.f32 %v260, %v246
  %v262 = vadd.f32 %v261, %v249
  %v263 = vadd.f32 %v262, %v251
  %v264 = vadd.f32 %v263, %v254
  %v265 = vadd.f32 %v264, %v256
  %v266 = vrot.slane %v265, 4
  %v267 = vadd.f32 %v265, %v266
  %v268 = vrot.slane %v267, 2
  %v269 = vadd.f32 %v267, %v268
  %v270 = vrot.slane %v269, 1
  %v271 = vadd.f32 %v269, %v270
  %v272 = vadd.f32 %v258, %v271
  %273 = vst [vmem:[%s5] sm:$0x1] %v272
  %v274 = vld [vmem:[%s6] sm:$0x1]
  %v275 = vmul.f32 %v239, %v239
  %v276 = vmul.f32 %v241, %v241
  %v277 = vmul.f32 %v244, %v244
  %v278 = vmul.f32 %v246, %v246
  %v279 = vmul.f32 %v249, %v249
  %v280 = vmul.f32 %v251, %v251
  %v281 = vmul.f32 %v254, %v254
  %v282 = vmul.f32 %v256, %v256
  %v283 = vadd.f32 %v275, %v276
  %v284 = vadd.f32 %v283, %v277
  %v285 = vadd.f32 %v284, %v278
  %v286 = vadd.f32 %v285, %v279
  %v287 = vadd.f32 %v286, %v280
  %v288 = vadd.f32 %v287, %v281
  %v289 = vadd.f32 %v288, %v282
  %v290 = vrot.slane %v289, 4
  %v291 = vadd.f32 %v289, %v290
  %v292 = vrot.slane %v291, 2
  %v293 = vadd.f32 %v291, %v292
  %v294 = vrot.slane %v293, 1
  %v295 = vadd.f32 %v293, %v294
  %v296 = vadd.f32 %v274, %v295
  %297 = vst [vmem:[%s6] sm:$0x1] %v296
  // Predicated region
  $region26: #{fc_forward.4} parent=0 // pred_check
    _
  $region27: #{fc_forward.4} parent=0 // pred_check_branch
    %299 = sbr.rel (0) target = $region29
  $region28: #{fc_forward.4} parent=0 // pred_region
    _
  $region29: #{fc_forward.4} parent=0 // pred_fallthru
    _
  // Predicated region
  $region30: #{fc_forward.4} parent=0 // pred_check
    _
  $region31: #{fc_forward.4} parent=0 // pred_check_branch
    %301 = sbr.rel (0) target = $region33
  $region32: #{fc_forward.4} parent=0 // pred_region
    _
  $region33: #{fc_forward.4} parent=0 // pred_fallthru
    _
  // Predicated region
  $region34: #{fc_forward.4} parent=0 // pred_check
    _
  $region35: #{fc_forward.4} parent=0 // pred_check_branch
    %303 = sbr.rel (0) target = $region37
  $region36: #{fc_forward.4} parent=0 // pred_region
    _
  $region37: #{fc_forward.4} parent=0 // pred_fallthru
    _
  // Predicated region
  $region38: #{fc_forward.4} parent=0 // pred_check
    _
  $region39: #{fc_forward.4} parent=0 // pred_check_branch
    %305 = sbr.rel (0) target = $region41
  $region40: #{fc_forward.4} parent=0 // pred_region
    _
  $region41: #{fc_forward.4} parent=0 // pred_fallthru
    _

// kernel: fc_forward.5
$region0: #{fc_forward.5}
  #allocation0 [shape = 'u32[]', space=smem, size = 0x4, offset = 0x4, fixed_abs, tag = 'smem constant byte address 0x4 - core index']
  #allocation1 [shape = 'u32[72,128]{1,0:T(1,128)}', space=vmem, size = 0x9000, scoped, tag = 'internal scratch']
  %s0 = inlined_call_operand.vmem [shape: bf16[64,16], index: 0, kind: input, shape index: {}]
  %s1 = inlined_call_operand.vmem [shape: bf16[16,128], index: 1, kind: input, shape index: {}]
  %s2 = inlined_call_operand.vmem [shape: bf16[128,128], index: 2, kind: input, shape index: {}]
  %s3 = inlined_call_operand.vmem [shape: f32[1,128], index: 3, kind: input, shape index: {}]
  %s4 = inlined_call_operand.vmem [shape: f32[1,128], index: 4, kind: input, shape index: {}]
  %s5 = inlined_call_operand.vmem [shape: f32[1,128], index: 5, kind: input, shape index: {}]
  %s6 = inlined_call_operand.vmem [shape: f32[1,128], index: 6, kind: input, shape index: {}]
  %s7 = inlined_call_operand.vmem [shape: f32[64,128], index: 7, kind: output, shape index: {}]
  %s8 = sld [smem:[#allocation0]]
  $region38: #{fc_forward.5} parent=0
    _
  %s10 = ssub.s32 1, %s8
  %s11 = scalar_select 0, %s10, %s8
  // Predicated region
  $region2: #{fc_forward.5} parent=0 // pred_check
    _
  $region3: #{fc_forward.5} parent=0 // pred_check_branch
    %13 = sbr.rel (0) target = $region5
  $region4: #{fc_forward.5} parent=0 // pred_region
    _
  $region5: #{fc_forward.5} parent=0 // pred_fallthru
    _
  // Predicated region
  $region6: #{fc_forward.5} parent=0 // pred_check
    _
  $region7: #{fc_forward.5} parent=0 // pred_check_branch
    %15 = sbr.rel (0) target = $region9
  $region8: #{fc_forward.5} parent=0 // pred_region
    _
  $region9: #{fc_forward.5} parent=0 // pred_fallthru
    _
  // Predicated region
  $region10: #{fc_forward.5} parent=0 // pred_check
    _
  $region11: #{fc_forward.5} parent=0 // pred_check_branch
    %17 = sbr.rel (0) target = $region13
  $region12: #{fc_forward.5} parent=0 // pred_region
    _
  $region13: #{fc_forward.5} parent=0 // pred_fallthru
    _
  // Predicated region
  $region14: #{fc_forward.5} parent=0 // pred_check
    _
  $region15: #{fc_forward.5} parent=0 // pred_check_branch
    %19 = sbr.rel (0) target = $region17
  $region16: #{fc_forward.5} parent=0 // pred_region
    _
  $region17: #{fc_forward.5} parent=0 // pred_fallthru
    _
  // Predicated region
  $region18: #{fc_forward.5} parent=0 // pred_check
    _
  $region19: #{fc_forward.5} parent=0 // pred_check_branch
    %21 = sbr.rel (0) target = $region21
  $region20: #{fc_forward.5} parent=0 // pred_region
    _
  $region21: #{fc_forward.5} parent=0 // pred_fallthru
    _
  // Predicated region
  $region22: #{fc_forward.5} parent=0 // pred_check
    _
  $region23: #{fc_forward.5} parent=0 // pred_check_branch
    %23 = sbr.rel (0) target = $region25
  $region24: #{fc_forward.5} parent=0 // pred_region
    _
  $region25: #{fc_forward.5} parent=0 // pred_fallthru
    _
  // Predicated region
  $region26: #{fc_forward.5} parent=0 // pred_check
    _
  $region27: #{fc_forward.5} parent=0 // pred_check_branch
    %25 = sbr.rel (0) target = $region29
  $region28: #{fc_forward.5} parent=0 // pred_region
    _
  $region29: #{fc_forward.5} parent=0 // pred_fallthru
    _
  %v27 = vld [vmem:[%s0] sm:$0xf]
  %v28 = vld [vmem:[%s0 + $0x4] sm:$0xf]
  %v29 = vld [vmem:[%s0 + $0x8] sm:$0xf]
  %v30 = vld [vmem:[%s0 + $0xc] sm:$0xf]
  %v31 = vld [vmem:[%s0 + $0x10] sm:$0xf]
  %v32 = vld [vmem:[%s0 + $0x14] sm:$0xf]
  %v33 = vld [vmem:[%s0 + $0x18] sm:$0xf]
  %v34 = vld [vmem:[%s0 + $0x1c] sm:$0xf]
  %v35 = vld [vmem:[%s1] sm:$0xf]
  %v36 = vld [vmem:[%s1 + $0x4] sm:$0xf]
  %v37 = vld [vmem:[%s2] sm:$0xf]
  %v38 = vld [vmem:[%s2 + $0x4] sm:$0xf]
  %v39 = vld [vmem:[%s2 + $0x8] sm:$0xf]
  %v40 = vld [vmem:[%s2 + $0xc] sm:$0xf]
  %v41 = vld [vmem:[%s2 + $0x10] sm:$0xf]
  %v42 = vld [vmem:[%s2 + $0x14] sm:$0xf]
  %v43 = vld [vmem:[%s2 + $0x18] sm:$0xf]
  %v44 = vld [vmem:[%s2 + $0x1c] sm:$0xf]
  %v45 = vld [vmem:[%s2 + $0x20] sm:$0xf]
  %v46 = vld [vmem:[%s2 + $0x24] sm:$0xf]
  %v47 = vld [vmem:[%s2 + $0x28] sm:$0xf]
  %v48 = vld [vmem:[%s2 + $0x2c] sm:$0xf]
  %v49 = vld [vmem:[%s2 + $0x30] sm:$0xf]
  %v50 = vld [vmem:[%s2 + $0x34] sm:$0xf]
  %v51 = vld [vmem:[%s2 + $0x38] sm:$0xf]
  %v52 = vld [vmem:[%s2 + $0x3c] sm:$0xf]
  %v53 = vld [vmem:[%s3] sm:$0x1]
  %v54 = vld [vmem:[%s4] sm:$0x1]
  %v55 = vld [vmem:[%s5] sm:$0x1]
  %v56 = vld [vmem:[%s6] sm:$0x1]
  %v65 = vunpack.c.l.b16 %v27
  %v66 = vunpack.c.l.b16 %v28
  %v67 = vunpack.c.l.b16 %v29
  %v68 = vunpack.c.l.b16 %v30
  %v69 = vunpack.c.l.b16 %v31
  %v70 = vunpack.c.l.b16 %v32
  %v71 = vunpack.c.l.b16 %v33
  %v72 = vunpack.c.l.b16 %v34
  %v73 = vpack.c.b16 %v66, %v65
  %v74 = vpack.c.b16 %v68, %v67
  %v75 = vpack.c.b16 %v70, %v69
  %v76 = vpack.c.b16 %v72, %v71
  %v79 = vunpack.c.l.b16 %v35
  %v80 = vunpack.c.l.b16 %v36
  %v81 = vpack.c.b16 %v80, %v79
  %vm83 = vcmask 130048
  %v85 = vsel %vm83, %v73, 0
  %v88 = vsel %vm83, %v74, 0
  %v91 = vsel %vm83, %v75, 0
  %v94 = vsel %vm83, %v76, 0
  %96 = vmatpush.bf16.msra.mxu0 0
  %97 = vmatpush.bf16.msra.mxu0 0
  %98 = vmatpush.bf16.msra.mxu0 0
  %99 = vmatpush.bf16.msra.mxu0 0
  %100 = vmatpush.bf16.msra.mxu0 0
  %101 = vmatpush.bf16.msra.mxu0 0
  %102 = vmatpush.bf16.msra.mxu0 0
  %103 = vmatpush.bf16.msra.mxu0 %v81
  %104 = vmatmul.bf16.gmra.mxu0 %v85
  %v105 = vpop.f32.mrf.mxu0
  %v106 = vadd.f32 0.0, %v105
  %v107 = vpop.f32.mrf.mxu0
  %v108 = vadd.f32 0.0, %v107
  %109 = vmatmul.bf16.gmra.mxu0 %v88
  %v110 = vpop.f32.mrf.mxu0
  %v111 = vadd.f32 0.0, %v110
  %v112 = vpop.f32.mrf.mxu0
  %v113 = vadd.f32 0.0, %v112
  %114 = vmatmul.bf16.gmra.mxu0 %v91
  %v115 = vpop.f32.mrf.mxu0
  %v116 = vadd.f32 0.0, %v115
  %v117 = vpop.f32.mrf.mxu0
  %v118 = vadd.f32 0.0, %v117
  %119 = vmatmul.bf16.gmra.mxu0 %v94
  %v120 = vpop.f32.mrf.mxu0
  %v121 = vadd.f32 0.0, %v120
  %v122 = vpop.f32.mrf.mxu0
  %v123 = vadd.f32 0.0, %v122
  %124 = vdwg.mxu0
  %v126 = vperm.slane %v53, 0
  %v128 = vmul.f32 %v106, %v126
  %v129 = vmul.f32 %v108, %v126
  %v130 = vmul.f32 %v111, %v126
  %v131 = vmul.f32 %v113, %v126
  %v132 = vmul.f32 %v116, %v126
  %v133 = vmul.f32 %v118, %v126
  %v134 = vmul.f32 %v121, %v126
  %v135 = vmul.f32 %v123, %v126
  %v137 = vperm.slane %v55, 0
  %v139 = vadd.f32 %v128, %v137
  %v140 = vadd.f32 %v129, %v137
  %v141 = vadd.f32 %v130, %v137
  %v142 = vadd.f32 %v131, %v137
  %v143 = vadd.f32 %v132, %v137
  %v144 = vadd.f32 %v133, %v137
  %v145 = vadd.f32 %v134, %v137
  %v146 = vadd.f32 %v135, %v137
  %v147 = vmax.f32 %v139, 0.0
  %v148 = vmax.f32 %v140, 0.0
  %v149 = vmax.f32 %v141, 0.0
  %v150 = vmax.f32 %v142, 0.0
  %v151 = vmax.f32 %v143, 0.0
  %v152 = vmax.f32 %v144, 0.0
  %v153 = vmax.f32 %v145, 0.0
  %v154 = vmax.f32 %v146, 0.0
  %v155 = vpack.c.bf16 %v148, %v147
  %v156 = vpack.c.bf16 %v150, %v149
  %v157 = vpack.c.bf16 %v152, %v151
  %v158 = vpack.c.bf16 %v154, %v153
  %v175 = vunpack.c.l.b16 %v37
  %v176 = vunpack.c.l.b16 %v38
  %v177 = vunpack.c.l.b16 %v39
  %v178 = vunpack.c.l.b16 %v40
  %v179 = vunpack.c.l.b16 %v41
  %v180 = vunpack.c.l.b16 %v42
  %v181 = vunpack.c.l.b16 %v43
  %v182 = vunpack.c.l.b16 %v44
  %v183 = vunpack.c.l.b16 %v45
  %v184 = vunpack.c.l.b16 %v46
  %v185 = vunpack.c.l.b16 %v47
  %v186 = vunpack.c.l.b16 %v48
  %v187 = vunpack.c.l.b16 %v49
  %v188 = vunpack.c.l.b16 %v50
  %v189 = vunpack.c.l.b16 %v51
  %v190 = vunpack.c.l.b16 %v52
  %v191 = vpack.c.b16 %v176, %v175
  %v192 = vpack.c.b16 %v178, %v177
  %v193 = vpack.c.b16 %v180, %v179
  %v194 = vpack.c.b16 %v182, %v181
  %v195 = vpack.c.b16 %v184, %v183
  %v196 = vpack.c.b16 %v186, %v185
  %v197 = vpack.c.b16 %v188, %v187
  %v198 = vpack.c.b16 %v190, %v189
  %207 = vmatpush.bf16.msra.mxu0 %v198
  %208 = vmatpush.bf16.msra.mxu0 %v197
  %209 = vmatpush.bf16.msra.mxu0 %v196
  %210 = vmatpush.bf16.msra.mxu0 %v195
  %211 = vmatpush.bf16.msra.mxu0 %v194
  %212 = vmatpush.bf16.msra.mxu0 %v193
  %213 = vmatpush.bf16.msra.mxu0 %v192
  %214 = vmatpush.bf16.msra.mxu0 %v191
  %215 = vmatmul.bf16.gmra.mxu0 %v155
  %v216 = vpop.f32.mrf.mxu0
  %v217 = vadd.f32 0.0, %v216
  %v218 = vpop.f32.mrf.mxu0
  %v219 = vadd.f32 0.0, %v218
  %220 = vmatmul.bf16.gmra.mxu0 %v156
  %v221 = vpop.f32.mrf.mxu0
  %v222 = vadd.f32 0.0, %v221
  %v223 = vpop.f32.mrf.mxu0
  %v224 = vadd.f32 0.0, %v223
  %225 = vmatmul.bf16.gmra.mxu0 %v157
  %v226 = vpop.f32.mrf.mxu0
  %v227 = vadd.f32 0.0, %v226
  %v228 = vpop.f32.mrf.mxu0
  %v229 = vadd.f32 0.0, %v228
  %230 = vmatmul.bf16.gmra.mxu0 %v158
  %v231 = vpop.f32.mrf.mxu0
  %v232 = vadd.f32 0.0, %v231
  %v233 = vpop.f32.mrf.mxu0
  %v234 = vadd.f32 0.0, %v233
  %235 = vdwg.mxu0
  %v237 = vperm.slane %v54, 0
  %v239 = vmul.f32 %v217, %v237
  %v240 = vmul.f32 %v219, %v237
  %v241 = vmul.f32 %v222, %v237
  %v242 = vmul.f32 %v224, %v237
  %v243 = vmul.f32 %v227, %v237
  %v244 = vmul.f32 %v229, %v237
  %v245 = vmul.f32 %v232, %v237
  %v246 = vmul.f32 %v234, %v237
  %v248 = vperm.slane %v56, 0
  %v250 = vadd.f32 %v239, %v248
  %v251 = vadd.f32 %v240, %v248
  %v252 = vadd.f32 %v241, %v248
  %v253 = vadd.f32 %v242, %v248
  %v254 = vadd.f32 %v243, %v248
  %v255 = vadd.f32 %v244, %v248
  %v256 = vadd.f32 %v245, %v248
  %v257 = vadd.f32 %v246, %v248
  %258 = vst [vmem:[%s7] sm:$0xff] %v250
  %259 = vst [vmem:[%s7 + $0x8] sm:$0xff] %v251
  %260 = vst [vmem:[%s7 + $0x10] sm:$0xff] %v252
  %261 = vst [vmem:[%s7 + $0x18] sm:$0xff] %v253
  %262 = vst [vmem:[%s7 + $0x20] sm:$0xff] %v254
  %263 = vst [vmem:[%s7 + $0x28] sm:$0xff] %v255
  %264 = vst [vmem:[%s7 + $0x30] sm:$0xff] %v256
  %265 = vst [vmem:[%s7 + $0x38] sm:$0xff] %v257
  // Predicated region
  $region30: #{fc_forward.5} parent=0 // pred_check
    _
  $region31: #{fc_forward.5} parent=0 // pred_check_branch
    %267 = sbr.rel (0) target = $region33
  $region32: #{fc_forward.5} parent=0 // pred_region
    _
  $region33: #{fc_forward.5} parent=0 // pred_fallthru
    _
  // Predicated region
  $region34: #{fc_forward.5} parent=0 // pred_check
    _
  $region35: #{fc_forward.5} parent=0 // pred_check_branch
    %269 = sbr.rel (0) target = $region37
  $region36: #{fc_forward.5} parent=0 // pred_region
    _
  $region37: #{fc_forward.5} parent=0 // pred_fallthru
    _

</llo_original>
